<compile_context>
chip_gen: v5e
topology: v5e:2x2
jax: 0.10.0
libtpu: 0.0.40
codegen_flags: <defaults>
</compile_context>

<pallas_src>
import functools

import jax
import jax.numpy as jnp
from jax.experimental import pallas as pl
from jax.experimental.pallas import tpu as pltpu


def _round_up(x: int, m: int) -> int:
    return ((x + m - 1) // m) * m


def _tpu_vmem_bytes() -> int:
    try:
        return int(pltpu.get_tpu_info().vmem_capacity_bytes)
    except Exception:
        return 64 * 1024 * 1024          # v7x-safe fallback (smallest VMEM per TC)


_VMEM_BYTES = _tpu_vmem_bytes()
# v7x: 64 MiB VMEM per TC -> keep scoped limit at 48 MiB. v5e/v6e: 128 MiB physical -> 64 MiB.
_VMEM_LIMIT_BYTES = (48 if _VMEM_BYTES <= (64 << 20) else 64) * 1024 * 1024
# Total *input* bytes streamed per grid step; double-buffering makes the live set ~2x this.
_STEP_INPUT_BYTES = max(_VMEM_BYTES // 8, 1 << 20)

_COMPILER_PARAMS = pltpu.CompilerParams(
    dimension_semantics=("parallel",),    # per-tile partial sums are independent
    vmem_limit_bytes=_VMEM_LIMIT_BYTES,
)


def _row_mult(dtype) -> int:
    # Sublane tiling multiple: 8 rows for 32-bit, 16 for bf16/fp16, 32 for 8-bit dtypes.
    return max(8, 32 // jnp.dtype(dtype).itemsize)


def _pick_tile_rows(n_rows: int, row_bytes: int, row_mult: int) -> int:
    """Row tile: multiple of row_mult, ~_STEP_INPUT_BYTES per step, >=2 grid steps when big."""
    t = _STEP_INPUT_BYTES // max(row_bytes, 1)
    t = max(row_mult, (t // row_mult) * row_mult)
    # Keep at least two grid steps when the problem is big enough to split, so the "parallel"
    # grid axis can shard across v7x's two TensorCores.
    if n_rows * row_bytes >= (1 << 20) and n_rows >= 2 * row_mult:
        half = _round_up(-(-n_rows // 2), row_mult)
        t = min(t, half)
    return min(t, _round_up(n_rows, row_mult))


# ---------------------------------------------------------------------------
# In-kernel per-tile helpers (masked partial sums).
# ---------------------------------------------------------------------------

def _row_valid_mask(tile_n: int, n_valid: int):
    row_ids = (pl.program_id(0) * tile_n
               + jax.lax.broadcasted_iota(jnp.int32, (tile_n, 1), 0))
    return row_ids < n_valid


def _ce_tile_sum(logits, tgt, row_valid):
    """Sum over valid rows of (logsumexp(logits) - logits[target])."""
    logits = logits.astype(jnp.float32)
    b, c = logits.shape
    m = jnp.max(logits, axis=-1, keepdims=True)
    lse = jnp.log(jnp.sum(jnp.exp(logits - m), axis=-1, keepdims=True)) + m
    cols = jax.lax.broadcasted_iota(jnp.int32, (b, c), 1)
    # Single vselect picks the target logit (no one-hot multiply).
    tgt_logit = jnp.sum(jnp.where(cols == tgt, logits, 0.0), axis=-1, keepdims=True)
    return jnp.sum(jnp.where(row_valid, lse - tgt_logit, 0.0))


def _sl1_tile_sum(pred, tgt, row_valid):
    """Sum over valid rows of elementwise SmoothL1 (beta=1)."""
    d = pred.astype(jnp.float32) - tgt.astype(jnp.float32)
    ad = jnp.abs(d)
    per_elem = jnp.where(ad < 1.0, 0.5 * d * d, ad - 0.5)
    per_row = jnp.sum(per_elem, axis=-1, keepdims=True)
    return jnp.sum(jnp.where(row_valid, per_row, 0.0))


# ---------------------------------------------------------------------------
# Kernels.
# ---------------------------------------------------------------------------

def _fused3_kernel(rpn_logits_ref, rpn_tgt_ref, bbox_pred_ref, bbox_tgt_ref,
                   det_logits_ref, det_tgt_ref, out_ref, *,
                   tile_n, n_valid, inv_n, inv_nb):
    valid = _row_valid_mask(tile_n, n_valid)
    ce = (_ce_tile_sum(rpn_logits_ref[...], rpn_tgt_ref[...], valid)
          + _ce_tile_sum(det_logits_ref[...], det_tgt_ref[...], valid))
    sl1 = _sl1_tile_sum(bbox_pred_ref[...], bbox_tgt_ref[...], valid)
    # Lane-dense unmasked store of this tile's (already mean-weighted) partial sum.
    out_ref[...] = jnp.full(out_ref.shape, ce * inv_n + sl1 * inv_nb, jnp.float32)


def _ce_kernel(logits_ref, tgt_ref, out_ref, *, tile_n, n_valid, inv_n):
    valid = _row_valid_mask(tile_n, n_valid)
    s = _ce_tile_sum(logits_ref[...], tgt_ref[...], valid)
    out_ref[...] = jnp.full(out_ref.shape, s * inv_n, jnp.float32)


def _sl1_kernel(pred_ref, tgt_ref, out_ref, *, tile_n, n_valid, inv_nb):
    valid = _row_valid_mask(tile_n, n_valid)
    s = _sl1_tile_sum(pred_ref[...], tgt_ref[...], valid)
    out_ref[...] = jnp.full(out_ref.shape, s * inv_nb, jnp.float32)


def _partial_sum_call(kernel, inputs, in_specs, num_tiles, cost):
    out = pl.pallas_call(
        kernel,
        out_shape=jax.ShapeDtypeStruct((num_tiles, 8, 128), jnp.float32),
        grid=(num_tiles,),
        in_specs=in_specs,
        out_specs=pl.BlockSpec((1, 8, 128), lambda i: (i, 0, 0)),
        compiler_params=_COMPILER_PARAMS,
        cost_estimate=cost,
    )(*inputs)
    # Each tile's scalar is replicated across 8*128 lanes -> dense reduce, then un-replicate.
    return jnp.sum(out) * (1.0 / (8.0 * 128.0))


# ---------------------------------------------------------------------------
# Standalone (fallback) losses: used only if the heads have different row counts.
# ---------------------------------------------------------------------------

def _cross_entropy_mean(logits, targets):
    n, c = logits.shape
    tgt = targets.astype(jnp.int32).reshape(-1, 1)
    row_bytes = c * jnp.dtype(logits.dtype).itemsize + 4
    mult = _row_mult(logits.dtype)
    tile_n = _pick_tile_rows(n, row_bytes, mult)
    num_tiles = pl.cdiv(n, tile_n)
    kernel = functools.partial(_ce_kernel, tile_n=tile_n, n_valid=n, inv_n=1.0 / n)
    cost = pl.CostEstimate(flops=6 * n * c, transcendentals=n * (c + 1),
                           bytes_accessed=n * row_bytes + num_tiles * 8 * 128 * 4)
    return _partial_sum_call(
        kernel, (logits, tgt),
        [pl.BlockSpec((tile_n, c), lambda i: (i, 0)),
         pl.BlockSpec((tile_n, 1), lambda i: (i, 0))],
        num_tiles, cost)


def _smooth_l1_mean(pred, target):
    n = pred.shape[0]
    pred2 = pred.reshape(n, -1)
    tgt2 = target.reshape(n, -1)
    b = pred2.shape[1]
    row_bytes = b * (jnp.dtype(pred2.dtype).itemsize + jnp.dtype(tgt2.dtype).itemsize)
    mult = max(_row_mult(pred2.dtype), _row_mult(tgt2.dtype))
    tile_n = _pick_tile_rows(n, row_bytes, mult)
    num_tiles = pl.cdiv(n, tile_n)
    kernel = functools.partial(_sl1_kernel, tile_n=tile_n, n_valid=n, inv_nb=1.0 / (n * b))
    cost = pl.CostEstimate(flops=6 * n * b, transcendentals=0,
                           bytes_accessed=n * row_bytes + num_tiles * 8 * 128 * 4)
    return _partial_sum_call(
        kernel, (pred2, tgt2),
        [pl.BlockSpec((tile_n, b), lambda i: (i, 0)),
         pl.BlockSpec((tile_n, b), lambda i: (i, 0))],
        num_tiles, cost)


# ---------------------------------------------------------------------------
# ObjectDetectionLoss.forward
# ---------------------------------------------------------------------------

def object_detection_loss(rpn_cls_score, rpn_bbox_pred, detection_output, targets):
    rpn_tcls, rpn_tbbox, det_tcls = targets

    n_a, c_rpn = rpn_cls_score.shape
    n_d, c_det = detection_output.shape
    n_b = rpn_bbox_pred.shape[0]

    if not (n_a == n_b == n_d):
        # Heads with different row counts: run each term as its own tiled kernel.
        return (_cross_entropy_mean(rpn_cls_score, rpn_tcls)
                + _smooth_l1_mean(rpn_bbox_pred, rpn_tbbox)
                + _cross_entropy_mean(detection_output, det_tcls))

    n = n_a
    bbox_pred = rpn_bbox_pred.reshape(n, -1)       # free contiguous reshape
    bbox_tgt = rpn_tbbox.reshape(n, -1)
    bb = bbox_pred.shape[1]
    rpn_tgt = rpn_tcls.astype(jnp.int32).reshape(-1, 1)
    det_tgt = det_tcls.astype(jnp.int32).reshape(-1, 1)

    row_bytes = (c_rpn * jnp.dtype(rpn_cls_score.dtype).itemsize + 4
                 + c_det * jnp.dtype(detection_output.dtype).itemsize + 4
                 + bb * (jnp.dtype(bbox_pred.dtype).itemsize
                         + jnp.dtype(bbox_tgt.dtype).itemsize))
    mult = max(_row_mult(rpn_cls_score.dtype), _row_mult(detection_output.dtype),
               _row_mult(bbox_pred.dtype), _row_mult(bbox_tgt.dtype))
    tile_n = _pick_tile_rows(n, row_bytes, mult)
    num_tiles = pl.cdiv(n, tile_n)

    kernel = functools.partial(_fused3_kernel, tile_n=tile_n, n_valid=n,
                               inv_n=1.0 / n, inv_nb=1.0 / (n * bb))
    in_specs = [
        pl.BlockSpec((tile_n, c_rpn), lambda i: (i, 0)),
        pl.BlockSpec((tile_n, 1), lambda i: (i, 0)),
        pl.BlockSpec((tile_n, bb), lambda i: (i, 0)),
        pl.BlockSpec((tile_n, bb), lambda i: (i, 0)),
        pl.BlockSpec((tile_n, c_det), lambda i: (i, 0)),
        pl.BlockSpec((tile_n, 1), lambda i: (i, 0)),
    ]
    cost = pl.CostEstimate(
        flops=n * (6 * (c_rpn + c_det) + 6 * bb),
        transcendentals=n * (c_rpn + c_det + 2),
        bytes_accessed=n * row_bytes + num_tiles * 8 * 128 * 4,
    )
    return _partial_sum_call(
        kernel,
        (rpn_cls_score, rpn_tgt, bbox_pred, bbox_tgt, detection_output, det_tgt),
        in_specs, num_tiles, cost)


# ---------------------------------------------------------------------------
# Pure-JAX reference + test
# ---------------------------------------------------------------------------

def _reference_loss(rpn_cls_score, rpn_bbox_pred, detection_output, targets):
    rpn_tcls, rpn_tbbox, det_tcls = targets

    def ce(logits, tgt):
        logits = logits.astype(jnp.float32)
        lse = jax.scipy.special.logsumexp(logits, axis=-1)
        picked = jnp.take_along_axis(logits, tgt[:, None].astype(jnp.int32), axis=-1)[:, 0]
        return jnp.mean(lse - picked)

    def sl1(p, t):
        d = p.astype(jnp.float32) - t.astype(jnp.float32)
        ad = jnp.abs(d)
        return jnp.mean(jnp.where(ad < 1.0, 0.5 * d * d, ad - 0.5))

    return (ce(rpn_cls_score, rpn_tcls) + sl1(rpn_bbox_pred, rpn_tbbox)
            + ce(detection_output, det_tcls))


if __name__ == "__main__":
    key = jax.random.PRNGKey(0)
    k1, k2, k3, k4, k5, k6 = jax.random.split(key, 6)

    # Deliberately not a multiple of 8 so the ragged last block + row-mask (no-pad) path runs.
    N = 10           # anchors / proposals (rows shared by all three loss terms)
    C_RPN = 16       # rpn classification classes
    C_DET = 32       # detection classification classes
    BBOX = 4         # (dx, dy, dw, dh)

    rpn_cls_score = jax.random.normal(k1, (N, C_RPN), dtype=jnp.float32)
    rpn_bbox_pred = jax.random.normal(k2, (N, BBOX), dtype=jnp.float32)
    detection_output = jax.random.normal(k3, (N, C_DET), dtype=jnp.float32)

    rpn_target_cls = jax.random.randint(k4, (N,), 0, C_RPN, dtype=jnp.int32)
    rpn_target_bbox = jax.random.normal(k5, (N, BBOX), dtype=jnp.float32)
    detection_target_class = jax.random.randint(k6, (N,), 0, C_DET, dtype=jnp.int32)

    targets = (rpn_target_cls, rpn_target_bbox, detection_target_class)

    loss_fn = jax.jit(object_detection_loss)
    loss = jax.block_until_ready(
        loss_fn(rpn_cls_score, rpn_bbox_pred, detection_output, targets))

    ref = _reference_loss(rpn_cls_score, rpn_bbox_pred, detection_output, targets)
    assert jnp.allclose(loss, ref, rtol=1e-5, atol=1e-5), (loss, ref)

    print("KERNEL_OK")
</pallas_src>

<mosaic_0001>
module attributes {stable_mosaic.version = 11 : i64} {
  func.func @_fused3_kernel(%arg0: i32, %arg1: memref<16x16xf32, #tpu.memory_space<vmem>>, %arg2: memref<16x1xi32, #tpu.memory_space<vmem>>, %arg3: memref<16x4xf32, #tpu.memory_space<vmem>>, %arg4: memref<16x4xf32, #tpu.memory_space<vmem>>, %arg5: memref<16x32xf32, #tpu.memory_space<vmem>>, %arg6: memref<16x1xi32, #tpu.memory_space<vmem>>, %arg7: memref<1x8x128xf32, #tpu.memory_space<vmem>>) attributes {dimension_semantics = [#tpu.dimension_semantics<parallel>], iteration_bounds = array<i64: 1>, scalar_prefetch = 0 : i64, scratch_operands = 0 : i64, tpu.core_type = #tpu.core_type<tc>, window_params = [{transform_indices = @transform_0, window_bounds = array<i64: 16, 16>}, {transform_indices = @transform_1, window_bounds = array<i64: 16, 1>}, {transform_indices = @transform_2, window_bounds = array<i64: 16, 4>}, {transform_indices = @transform_3, window_bounds = array<i64: 16, 4>}, {transform_indices = @transform_4, window_bounds = array<i64: 16, 32>}, {transform_indices = @transform_5, window_bounds = array<i64: 16, 1>}, {transform_indices = @transform_6, window_bounds = array<i64: 1, 8, 128>}]} {
    %c16_i32 = arith.constant 16 : i32
    %0 = arith.muli %arg0, %c16_i32 : i32
    %1 = tpu.iota {dimensions = array<i32: 0>} : vector<16x1xi32>
    %2 = vector.broadcast %0 : i32 to vector<16x1xi32>
    %3 = arith.addi %2, %1 : vector<16x1xi32>
    %c10_i32 = arith.constant 10 : i32
    %4 = vector.broadcast %c10_i32 : i32 to vector<16x1xi32>
    %5 = arith.cmpi slt, %3, %4 : vector<16x1xi32>
    %c0 = arith.constant 0 : index
    %c0_0 = arith.constant 0 : index
    %6 = vector.load %arg1[%c0, %c0_0] : memref<16x16xf32, #tpu.memory_space<vmem>>, vector<16x16xf32>
    %c0_1 = arith.constant 0 : index
    %c0_2 = arith.constant 0 : index
    %7 = vector.load %arg2[%c0_1, %c0_2] : memref<16x1xi32, #tpu.memory_space<vmem>>, vector<16x1xi32>
    %cst = arith.constant dense<0xFF800000> : vector<16xf32>
    %8 = vector.multi_reduction <maximumf>, %6, %cst [1] : vector<16x16xf32> to vector<16xf32>
    %9 = vector.shape_cast %8 : vector<16xf32> to vector<16x1xf32>
    %10 = vector.broadcast %9 : vector<16x1xf32> to vector<16x16xf32>
    %11 = arith.subf %6, %10 : vector<16x16xf32>
    %12 = math.exp %11 : vector<16x16xf32>
    %cst_3 = arith.constant dense<0.000000e+00> : vector<16xf32>
    %13 = vector.multi_reduction <add>, %12, %cst_3 [1] : vector<16x16xf32> to vector<16xf32>
    %14 = vector.shape_cast %13 : vector<16xf32> to vector<16x1xf32>
    %15 = math.log %14 : vector<16x1xf32>
    %16 = arith.addf %15, %9 : vector<16x1xf32>
    %17 = tpu.iota {dimensions = array<i32: 1>} : vector<16x16xi32>
    %18 = vector.broadcast %7 : vector<16x1xi32> to vector<16x16xi32>
    %19 = arith.cmpi eq, %17, %18 : vector<16x16xi32>
    %cst_4 = arith.constant 0.000000e+00 : f32
    %20 = vector.broadcast %cst_4 : f32 to vector<16x16xf32>
    %21 = arith.select %19, %6, %20 : vector<16x16xi1>, vector<16x16xf32>
    %cst_5 = arith.constant dense<0.000000e+00> : vector<16xf32>
    %22 = vector.multi_reduction <add>, %21, %cst_5 [1] : vector<16x16xf32> to vector<16xf32>
    %23 = vector.shape_cast %22 : vector<16xf32> to vector<16x1xf32>
    %24 = arith.subf %16, %23 : vector<16x1xf32>
    %cst_6 = arith.constant 0.000000e+00 : f32
    %25 = vector.broadcast %cst_6 : f32 to vector<16x1xf32>
    %26 = arith.select %5, %24, %25 : vector<16x1xi1>, vector<16x1xf32>
    %27 = vector.shape_cast %26 : vector<16x1xf32> to vector<1x16x1xf32>
    %cst_7 = arith.constant dense<0.000000e+00> : vector<1xf32>
    %28 = vector.multi_reduction <add>, %27, %cst_7 [1, 2] : vector<1x16x1xf32> to vector<1xf32>
    %29 = vector.shape_cast %28 : vector<1xf32> to vector<1x1x1xf32>
    %30 = vector.extract %29[0, 0, 0] : f32 from vector<1x1x1xf32>
    %c0_8 = arith.constant 0 : index
    %c0_9 = arith.constant 0 : index
    %31 = vector.load %arg5[%c0_8, %c0_9] : memref<16x32xf32, #tpu.memory_space<vmem>>, vector<16x32xf32>
    %c0_10 = arith.constant 0 : index
    %c0_11 = arith.constant 0 : index
    %32 = vector.load %arg6[%c0_10, %c0_11] : memref<16x1xi32, #tpu.memory_space<vmem>>, vector<16x1xi32>
    %cst_12 = arith.constant dense<0xFF800000> : vector<16xf32>
    %33 = vector.multi_reduction <maximumf>, %31, %cst_12 [1] : vector<16x32xf32> to vector<16xf32>
    %34 = vector.shape_cast %33 : vector<16xf32> to vector<16x1xf32>
    %35 = vector.broadcast %34 : vector<16x1xf32> to vector<16x32xf32>
    %36 = arith.subf %31, %35 : vector<16x32xf32>
    %37 = math.exp %36 : vector<16x32xf32>
    %cst_13 = arith.constant dense<0.000000e+00> : vector<16xf32>
    %38 = vector.multi_reduction <add>, %37, %cst_13 [1] : vector<16x32xf32> to vector<16xf32>
    %39 = vector.shape_cast %38 : vector<16xf32> to vector<16x1xf32>
    %40 = math.log %39 : vector<16x1xf32>
    %41 = arith.addf %40, %34 : vector<16x1xf32>
    %42 = tpu.iota {dimensions = array<i32: 1>} : vector<16x32xi32>
    %43 = vector.broadcast %32 : vector<16x1xi32> to vector<16x32xi32>
    %44 = arith.cmpi eq, %42, %43 : vector<16x32xi32>
    %cst_14 = arith.constant 0.000000e+00 : f32
    %45 = vector.broadcast %cst_14 : f32 to vector<16x32xf32>
    %46 = arith.select %44, %31, %45 : vector<16x32xi1>, vector<16x32xf32>
    %cst_15 = arith.constant dense<0.000000e+00> : vector<16xf32>
    %47 = vector.multi_reduction <add>, %46, %cst_15 [1] : vector<16x32xf32> to vector<16xf32>
    %48 = vector.shape_cast %47 : vector<16xf32> to vector<16x1xf32>
    %49 = arith.subf %41, %48 : vector<16x1xf32>
    %cst_16 = arith.constant 0.000000e+00 : f32
    %50 = vector.broadcast %cst_16 : f32 to vector<16x1xf32>
    %51 = arith.select %5, %49, %50 : vector<16x1xi1>, vector<16x1xf32>
    %52 = vector.shape_cast %51 : vector<16x1xf32> to vector<1x16x1xf32>
    %cst_17 = arith.constant dense<0.000000e+00> : vector<1xf32>
    %53 = vector.multi_reduction <add>, %52, %cst_17 [1, 2] : vector<1x16x1xf32> to vector<1xf32>
    %54 = vector.shape_cast %53 : vector<1xf32> to vector<1x1x1xf32>
    %55 = vector.extract %54[0, 0, 0] : f32 from vector<1x1x1xf32>
    %56 = arith.addf %30, %55 : f32
    %c0_18 = arith.constant 0 : index
    %c0_19 = arith.constant 0 : index
    %57 = vector.load %arg3[%c0_18, %c0_19] : memref<16x4xf32, #tpu.memory_space<vmem>>, vector<16x4xf32>
    %c0_20 = arith.constant 0 : index
    %c0_21 = arith.constant 0 : index
    %58 = vector.load %arg4[%c0_20, %c0_21] : memref<16x4xf32, #tpu.memory_space<vmem>>, vector<16x4xf32>
    %59 = arith.subf %57, %58 : vector<16x4xf32>
    %60 = math.absf %59 : vector<16x4xf32>
    %cst_22 = arith.constant 1.000000e+00 : f32
    %61 = vector.broadcast %cst_22 : f32 to vector<16x4xf32>
    %62 = arith.cmpf olt, %60, %61 : vector<16x4xf32>
    %cst_23 = arith.constant 5.000000e-01 : f32
    %63 = vector.broadcast %cst_23 : f32 to vector<16x4xf32>
    %64 = arith.mulf %63, %59 : vector<16x4xf32>
    %65 = arith.mulf %64, %59 : vector<16x4xf32>
    %cst_24 = arith.constant 5.000000e-01 : f32
    %66 = vector.broadcast %cst_24 : f32 to vector<16x4xf32>
    %67 = arith.subf %60, %66 : vector<16x4xf32>
    %68 = arith.select %62, %65, %67 : vector<16x4xi1>, vector<16x4xf32>
    %cst_25 = arith.constant dense<0.000000e+00> : vector<16xf32>
    %69 = vector.multi_reduction <add>, %68, %cst_25 [1] : vector<16x4xf32> to vector<16xf32>
    %70 = vector.shape_cast %69 : vector<16xf32> to vector<16x1xf32>
    %cst_26 = arith.constant 0.000000e+00 : f32
    %71 = vector.broadcast %cst_26 : f32 to vector<16x1xf32>
    %72 = arith.select %5, %70, %71 : vector<16x1xi1>, vector<16x1xf32>
    %73 = vector.shape_cast %72 : vector<16x1xf32> to vector<1x16x1xf32>
    %cst_27 = arith.constant dense<0.000000e+00> : vector<1xf32>
    %74 = vector.multi_reduction <add>, %73, %cst_27 [1, 2] : vector<1x16x1xf32> to vector<1xf32>
    %75 = vector.shape_cast %74 : vector<1xf32> to vector<1x1x1xf32>
    %76 = vector.extract %75[0, 0, 0] : f32 from vector<1x1x1xf32>
    %cst_28 = arith.constant 1.000000e-01 : f32
    %77 = arith.mulf %56, %cst_28 : f32
    %cst_29 = arith.constant 2.500000e-02 : f32
    %78 = arith.mulf %76, %cst_29 : f32
    %79 = arith.addf %77, %78 : f32
    %80 = vector.broadcast %79 : f32 to vector<1x8x128xf32>
    %c0_30 = arith.constant 0 : index
    %c0_31 = arith.constant 0 : index
    %c0_32 = arith.constant 0 : index
    %81 = vector.load %arg7[%c0_30, %c0_31, %c0_32] : memref<1x8x128xf32, #tpu.memory_space<vmem>>, vector<1x8x128xf32>
    tpu.vector_store %arg7[%c0_30, %c0_31, %c0_32], %80 {strides = array<i32>} : memref<1x8x128xf32, #tpu.memory_space<vmem>>, vector<1x8x128xf32>,
    return
  }
  func.func @transform_0(%arg0: i32) -> (i32, i32) {
    %c0_i32 = arith.constant 0 : i32
    %c0_i32_0 = arith.constant 0 : i32
    return %arg0, %c0_i32 : i32, i32
  }
  func.func @transform_1(%arg0: i32) -> (i32, i32) {
    %c0_i32 = arith.constant 0 : i32
    %c0_i32_0 = arith.constant 0 : i32
    return %arg0, %c0_i32 : i32, i32
  }
  func.func @transform_2(%arg0: i32) -> (i32, i32) {
    %c0_i32 = arith.constant 0 : i32
    %c0_i32_0 = arith.constant 0 : i32
    return %arg0, %c0_i32 : i32, i32
  }
  func.func @transform_3(%arg0: i32) -> (i32, i32) {
    %c0_i32 = arith.constant 0 : i32
    %c0_i32_0 = arith.constant 0 : i32
    return %arg0, %c0_i32 : i32, i32
  }
  func.func @transform_4(%arg0: i32) -> (i32, i32) {
    %c0_i32 = arith.constant 0 : i32
    %c0_i32_0 = arith.constant 0 : i32
    return %arg0, %c0_i32 : i32, i32
  }
  func.func @transform_5(%arg0: i32) -> (i32, i32) {
    %c0_i32 = arith.constant 0 : i32
    %c0_i32_0 = arith.constant 0 : i32
    return %arg0, %c0_i32 : i32, i32
  }
  func.func @transform_6(%arg0: i32) -> (i32, i32, i32) {
    %c0_i32 = arith.constant 0 : i32
    %c0_i32_0 = arith.constant 0 : i32
    %c0_i32_1 = arith.constant 0 : i32
    return %arg0, %c0_i32, %c0_i32_0 : i32, i32, i32
  }
}

</mosaic_0001>

<llo_original>
// kernel: object_detection_loss.1
$region0: #{object_detection_loss.1}
  #allocation0 [shape = 'u32[]', space=smem, size = 0x4, offset = 0x4, fixed_abs, tag = 'smem constant byte address 0x4 - core index']
  #allocation1 [shape = 'u32[72,128]{1,0:T(1,128)}', space=vmem, size = 0x9000, scoped, tag = 'internal scratch']
  %s0 = inlined_call_operand.vmem [shape: f32[10,16], index: 0, kind: input, shape index: {}]
  %s1 = inlined_call_operand.vmem [shape: s32[10,1], index: 1, kind: input, shape index: {}]
  %s2 = inlined_call_operand.vmem [shape: f32[10,4], index: 2, kind: input, shape index: {}]
  %s3 = inlined_call_operand.vmem [shape: f32[10,4], index: 3, kind: input, shape index: {}]
  %s4 = inlined_call_operand.vmem [shape: f32[10,32], index: 4, kind: input, shape index: {}]
  %s5 = inlined_call_operand.vmem [shape: s32[10,1], index: 5, kind: input, shape index: {}]
  %s6 = inlined_call_operand.vmem [shape: f32[1,8,128], index: 6, kind: output, shape index: {}]
  %s7 = sld [smem:[#allocation0]]
  $region34: #{object_detection_loss.1} parent=0
    _
  %s9 = ssub.s32 1, %s7
  %s10 = scalar_select 0, %s9, %s7
  // Predicated region
  $region2: #{object_detection_loss.1} parent=0 // pred_check
    _
  $region3: #{object_detection_loss.1} parent=0 // pred_check_branch
    %12 = sbr.rel (0) target = $region5
  $region4: #{object_detection_loss.1} parent=0 // pred_region
    _
  $region5: #{object_detection_loss.1} parent=0 // pred_fallthru
    _
  // Predicated region
  $region6: #{object_detection_loss.1} parent=0 // pred_check
    _
  $region7: #{object_detection_loss.1} parent=0 // pred_check_branch
    %14 = sbr.rel (0) target = $region9
  $region8: #{object_detection_loss.1} parent=0 // pred_region
    _
  $region9: #{object_detection_loss.1} parent=0 // pred_fallthru
    _
  // Predicated region
  $region10: #{object_detection_loss.1} parent=0 // pred_check
    _
  $region11: #{object_detection_loss.1} parent=0 // pred_check_branch
    %16 = sbr.rel (0) target = $region13
  $region12: #{object_detection_loss.1} parent=0 // pred_region
    _
  $region13: #{object_detection_loss.1} parent=0 // pred_fallthru
    _
  // Predicated region
  $region14: #{object_detection_loss.1} parent=0 // pred_check
    _
  $region15: #{object_detection_loss.1} parent=0 // pred_check_branch
    %18 = sbr.rel (0) target = $region17
  $region16: #{object_detection_loss.1} parent=0 // pred_region
    _
  $region17: #{object_detection_loss.1} parent=0 // pred_fallthru
    _
  // Predicated region
  $region18: #{object_detection_loss.1} parent=0 // pred_check
    _
  $region19: #{object_detection_loss.1} parent=0 // pred_check_branch
    %20 = sbr.rel (0) target = $region21
  $region20: #{object_detection_loss.1} parent=0 // pred_region
    _
  $region21: #{object_detection_loss.1} parent=0 // pred_fallthru
    _
  // Predicated region
  $region22: #{object_detection_loss.1} parent=0 // pred_check
    _
  $region23: #{object_detection_loss.1} parent=0 // pred_check_branch
    %22 = sbr.rel (0) target = $region25
  $region24: #{object_detection_loss.1} parent=0 // pred_region
    _
  $region25: #{object_detection_loss.1} parent=0 // pred_fallthru
    _
  %s23 = smul.u32 0, 16
  %v24 = vlaneseq
  %v25 = vshrl.u32 %v24, 7
  %v26 = vadd.s32 %v25, 8
  %v27 = vstv %s23
  %v28 = vadd.s32 %v27, %v25
  %v29 = vadd.s32 %v27, %v26
  %vm30 = vcmp.lt.s32.totalorder %v28, 10
  %vm31 = vcmp.lt.s32.totalorder %v29, 10
  %v32 = vld [vmem:[%s0] sm:$0xff]
  %v33 = vld [vmem:[%s0 + $0x8] sm:$0xff]
  %v34 = vld [vmem:[%s1] sm:$0xff]
  %v35 = vld [vmem:[%s1 + $0x8] sm:$0xff]
  %vm36 = vcmask 130048
  %v37 = vsel %vm36, %v32, -inf
  %38 = vmax.xlane.f32.xlu0 %v37
  %v39 = vpop.xlane.xlu0 %38
  %v40 = vsel %vm36, %v33, -inf
  %41 = vmax.xlane.f32.xlu0 %v40
  %v42 = vpop.xlane.xlu0 %41
  %v43 = vsub.f32 %v32, %v39
  %v44 = vsub.f32 %v33, %v42
  %v45 = vmul.f32 %v43, 1.442695
  %v46 = vpow.pop %v45
  %v47 = vmul.f32 %v44, 1.442695
  %v48 = vpow.pop %v47
  %v49 = vsel %vm36, %v46, 0.0
  %50 = vadd.xlane.f32.xlu0 %v49
  %v51 = vpop.xlane.xlu0 %50
  %v52 = vsel %vm36, %v48, 0.0
  %53 = vadd.xlane.f32.xlu0 %v52
  %v54 = vpop.xlane.xlu0 %53
  %v55 = vlog2.pop %v51
  %v56 = vmul.f32 %v55, 0.6931472
  %v57 = vlog2.pop %v54
  %v58 = vmul.f32 %v57, 0.6931472
  %v59 = vadd.f32 %v56, %v39
  %v60 = vadd.f32 %v58, %v42
  %v61 = vlaneseq
  %v62 = vand.u32 %v61, 127
  %63 = vset.pattern.permute.xlu0 0
  %64 = vperm.xlu0 %63, %v34
  %v65 = vpop.permute.xlu0 %64
  %66 = vset.pattern.permute.xlu0 0
  %67 = vperm.xlu0 %66, %v35
  %v68 = vpop.permute.xlu0 %67
  %vm69 = vcmp.eq.s32.totalorder %v62, %v65
  %vm70 = vcmp.eq.s32.totalorder %v62, %v68
  %v71 = vsel %vm69, %v32, 0.0
  %v72 = vsel %vm70, %v33, 0.0
  %v73 = vsel %vm36, %v71, 0.0
  %74 = vadd.xlane.f32.xlu0 %v73
  %v75 = vpop.xlane.xlu0 %74
  %v76 = vsel %vm36, %v72, 0.0
  %77 = vadd.xlane.f32.xlu0 %v76
  %v78 = vpop.xlane.xlu0 %77
  %v79 = vsub.f32 %v59, %v75
  %v80 = vsub.f32 %v60, %v78
  %v81 = vsel %vm30, %v79, 0.0
  %v82 = vsel %vm31, %v80, 0.0
  %vm83 = vcmask 7168
  %v84 = vsel %vm83, %v81, 0.0
  %v85 = vsel %vm83, %v82, 0.0
  %v86 = vadd.f32 %v84, %v85
  %87 = vadd.xlane.f32.xlu0 %v86
  %v88 = vpop.xlane.xlu0 %87
  %v89 = vrot.slane %v88, 4
  %v90 = vadd.f32 %v88, %v89
  %v91 = vrot.slane %v90, 2
  %v92 = vadd.f32 %v90, %v91
  %v93 = vrot.slane %v92, 1
  %v94 = vadd.f32 %v92, %v93
  %s95 = vtos %v94
  %v96 = vld [vmem:[%s4] sm:$0xff]
  %v97 = vld [vmem:[%s4 + $0x8] sm:$0xff]
  %v98 = vld [vmem:[%s5] sm:$0xff]
  %v99 = vld [vmem:[%s5 + $0x8] sm:$0xff]
  %vm100 = vcmask 261120
  %v101 = vsel %vm100, %v96, -inf
  %102 = vmax.xlane.f32.xlu0 %v101
  %v103 = vpop.xlane.xlu0 %102
  %v104 = vsel %vm100, %v97, -inf
  %105 = vmax.xlane.f32.xlu0 %v104
  %v106 = vpop.xlane.xlu0 %105
  %v107 = vsub.f32 %v96, %v103
  %v108 = vsub.f32 %v97, %v106
  %v109 = vmul.f32 %v107, 1.442695
  %v110 = vpow.pop %v109
  %v111 = vmul.f32 %v108, 1.442695
  %v112 = vpow.pop %v111
  %v113 = vsel %vm100, %v110, 0.0
  %114 = vadd.xlane.f32.xlu0 %v113
  %v115 = vpop.xlane.xlu0 %114
  %v116 = vsel %vm100, %v112, 0.0
  %117 = vadd.xlane.f32.xlu0 %v116
  %v118 = vpop.xlane.xlu0 %117
  %v119 = vlog2.pop %v115
  %v120 = vmul.f32 %v119, 0.6931472
  %v121 = vlog2.pop %v118
  %v122 = vmul.f32 %v121, 0.6931472
  %v123 = vadd.f32 %v120, %v103
  %v124 = vadd.f32 %v122, %v106
  %125 = vset.pattern.permute.xlu0 0
  %126 = vperm.xlu0 %125, %v98
  %v127 = vpop.permute.xlu0 %126
  %128 = vset.pattern.permute.xlu0 0
  %129 = vperm.xlu0 %128, %v99
  %v130 = vpop.permute.xlu0 %129
  %vm131 = vcmp.eq.s32.totalorder %v62, %v127
  %vm132 = vcmp.eq.s32.totalorder %v62, %v130
  %v133 = vsel %vm131, %v96, 0.0
  %v134 = vsel %vm132, %v97, 0.0
  %v135 = vsel %vm100, %v133, 0.0
  %136 = vadd.xlane.f32.xlu0 %v135
  %v137 = vpop.xlane.xlu0 %136
  %v138 = vsel %vm100, %v134, 0.0
  %139 = vadd.xlane.f32.xlu0 %v138
  %v140 = vpop.xlane.xlu0 %139
  %v141 = vsub.f32 %v123, %v137
  %v142 = vsub.f32 %v124, %v140
  %v143 = vsel %vm30, %v141, 0.0
  %v144 = vsel %vm31, %v142, 0.0
  %v145 = vsel %vm83, %v143, 0.0
  %v146 = vsel %vm83, %v144, 0.0
  %v147 = vadd.f32 %v145, %v146
  %148 = vadd.xlane.f32.xlu0 %v147
  %v149 = vpop.xlane.xlu0 %148
  %v150 = vrot.slane %v149, 4
  %v151 = vadd.f32 %v149, %v150
  %v152 = vrot.slane %v151, 2
  %v153 = vadd.f32 %v151, %v152
  %v154 = vrot.slane %v153, 1
  %v155 = vadd.f32 %v153, %v154
  %s156 = vtos %v155
  %s157 = sadd.f32 %s95, %s156
  %v158 = vld [vmem:[%s2] sm:$0xff]
  %v159 = vld [vmem:[%s2 + $0x8] sm:$0xff]
  %v160 = vld [vmem:[%s3] sm:$0xff]
  %v161 = vld [vmem:[%s3 + $0x8] sm:$0xff]
  %v162 = vsub.f32 %v158, %v160
  %v163 = vsub.f32 %v159, %v161
  %v164 = vand.u32 2147483647, %v162
  %v165 = vand.u32 2147483647, %v163
  %vm166 = vcmp.lt.f32.partialorder %v164, 1.0
  %vm167 = vcmp.lt.f32.partialorder %v165, 1.0
  %v168 = vmul.f32 %v162, 0.5
  %v169 = vmul.f32 %v163, 0.5
  %v170 = vmul.f32 %v168, %v162
  %v171 = vmul.f32 %v169, %v163
  %v172 = vsub.f32 %v164, 0.5
  %v173 = vsub.f32 %v165, 0.5
  %v174 = vsel %vm166, %v170, %v172
  %v175 = vsel %vm167, %v171, %v173
  %vm176 = vcmask 31744
  %v177 = vsel %vm176, %v174, 0.0
  %178 = vadd.xlane.f32.xlu0 %v177
  %v179 = vpop.xlane.xlu0 %178
  %v180 = vsel %vm176, %v175, 0.0
  %181 = vadd.xlane.f32.xlu0 %v180
  %v182 = vpop.xlane.xlu0 %181
  %v183 = vsel %vm30, %v179, 0.0
  %v184 = vsel %vm31, %v182, 0.0
  %v185 = vsel %vm83, %v183, 0.0
  %v186 = vsel %vm83, %v184, 0.0
  %v187 = vadd.f32 %v185, %v186
  %188 = vadd.xlane.f32.xlu0 %v187
  %v189 = vpop.xlane.xlu0 %188
  %v190 = vrot.slane %v189, 4
  %v191 = vadd.f32 %v189, %v190
  %v192 = vrot.slane %v191, 2
  %v193 = vadd.f32 %v191, %v192
  %v194 = vrot.slane %v193, 1
  %v195 = vadd.f32 %v193, %v194
  %s196 = vtos %v195
  %s197 = smul.f32 %s157, 0.1
  %s198 = smul.f32 %s196, 0.025
  %s199 = sadd.f32 %s197, %s198
  %v200 = vstv %s199
  %201 = vst [vmem:[%s6] sm:$0xff] %v200
  // Predicated region
  $region26: #{object_detection_loss.1} parent=0 // pred_check
    _
  $region27: #{object_detection_loss.1} parent=0 // pred_check_branch
    %203 = sbr.rel (0) target = $region29
  $region28: #{object_detection_loss.1} parent=0 // pred_region
    _
  $region29: #{object_detection_loss.1} parent=0 // pred_fallthru
    _
  // Predicated region
  $region30: #{object_detection_loss.1} parent=0 // pred_check
    _
  $region31: #{object_detection_loss.1} parent=0 // pred_check_branch
    %205 = sbr.rel (0) target = $region33
  $region32: #{object_detection_loss.1} parent=0 // pred_region
    _
  $region33: #{object_detection_loss.1} parent=0 // pred_fallthru
    _

</llo_original>
